<compile_context>
chip_gen: v5e
topology: v5e:2x2
jax: 0.10.0
libtpu: 0.0.40
codegen_flags: <defaults>
</compile_context>

<pallas_src>
import jax
import jax.numpy as jnp
from jax.experimental import pallas as pl
from jax.experimental.pallas import tpu as pltpu

LANES = 128


def make_surface_pos_emb_2d(image_height, image_width, patch_height, patch_width,
                            dim, temperature=10000.0):
    """Deterministically build the (seq, dim) sincos table, mirroring __init__."""
    assert dim % 4 == 0, "feature dimension must be multiple of 4 for sincos emb"
    assert dim >= 8, "dim // 4 - 1 must be nonzero (dim >= 8) for the omega schedule"
    gh = image_height // patch_height
    gw = image_width // patch_width
    y, x = jnp.meshgrid(jnp.arange(gh, dtype=jnp.float32),
                        jnp.arange(gw, dtype=jnp.float32), indexing="ij")
    omega = jnp.arange(dim // 4, dtype=jnp.float32) / (dim // 4 - 1)
    omega = 1.0 / (temperature ** omega)
    y = y.reshape(-1)[:, None] * omega[None, :]
    x = x.reshape(-1)[:, None] * omega[None, :]
    pe = jnp.concatenate((jnp.sin(x), jnp.cos(x), jnp.sin(y), jnp.cos(y)), axis=1)
    return pe  # (gh*gw, dim) float32


def _add_pe_kernel(x_ref, pe_ref, o_ref):
    # x_ref/o_ref: (b_tile, r_tile, 128); pe_ref: (r_tile, 128), broadcast over batch.
    o_ref[...] = x_ref[...] + pe_ref[...]


def _sublane_multiple(dtype):
    # f32 -> 8, bf16 -> 16, int8/fp8 -> 32 (packed dtypes pack along sublanes).
    return max(8, 32 // jnp.dtype(dtype).itemsize)


def _choose_tiles(B, R, itemsize, sub_m, target_block_bytes):
    """Pick (b_tile, r_tile) so each x block is ~target_block_bytes."""
    target_rows = max(sub_m, target_block_bytes // (LANES * itemsize))
    if R <= target_rows:
        # Full row extent (exempt from the sublane-multiple rule); grow the batch
        # block so each grid step still moves enough bytes.
        tile_r = int(R)
        b_tile = int(max(1, min(B, target_rows // max(R, 1))))
    else:
        tile_r = int((target_rows // sub_m) * sub_m)
        b_tile = 1
    return b_tile, tile_r


def _run_add(x3, pe2, target_block_bytes):
    """x3: (B, R, 128); pe2: (R, 128). Lane-dense tiled broadcast add."""
    B, R, L = x3.shape
    itemsize = jnp.dtype(x3.dtype).itemsize
    sub_m = _sublane_multiple(x3.dtype)
    b_tile, tile_r = _choose_tiles(B, R, itemsize, sub_m, target_block_bytes)

    # Batch innermost -> pe block index is constant across the inner loop, so the
    # pe tile is fetched once per row-block, not once per batch element.
    grid = (pl.cdiv(R, tile_r), pl.cdiv(B, b_tile))

    x_block_bytes = b_tile * tile_r * L * itemsize
    pe_block_bytes = tile_r * L * itemsize
    # x + out + pe, each double-buffered, plus ~25% headroom; floor at 16 MiB and
    # stay comfortably under v7x's 64 MiB physical VMEM.
    vmem_limit = int(1.25 * 2 * (2 * x_block_bytes + pe_block_bytes)) + (1 << 20)
    vmem_limit = max(vmem_limit, 16 << 20)
    vmem_limit = min(vmem_limit, 48 << 20)

    cost = pl.CostEstimate(
        flops=B * R * L,
        transcendentals=0,
        bytes_accessed=(2 * B * R * L + R * L) * itemsize,
    )

    return pl.pallas_call(
        _add_pe_kernel,
        out_shape=jax.ShapeDtypeStruct((B, R, L), x3.dtype),
        grid_spec=pl.GridSpec(
            grid=grid,
            in_specs=[
                pl.BlockSpec((b_tile, tile_r, L), lambda r, b: (b, r, 0)),
                pl.BlockSpec((tile_r, L), lambda r, b: (r, 0)),
            ],
            out_specs=pl.BlockSpec((b_tile, tile_r, L), lambda r, b: (b, r, 0)),
        ),
        compiler_params=pltpu.CompilerParams(
            dimension_semantics=("parallel", "parallel"),
            vmem_limit_bytes=vmem_limit),
        cost_estimate=cost,
    )(x3, pe2)


def surface_pos_emb_2d_forward(x, pe, *, target_block_bytes=2 << 20,
                               min_bytes_for_kernel=1 << 20, force_kernel=False):
    """x: (B, S, D); pe: (S, D) table. Returns x + pe broadcast over batch."""
    B, S, D = x.shape
    assert pe.shape == (S, D)
    pe = pe.astype(x.dtype)  # one-time cast, matches torch `.to(dtype=x.dtype)`

    itemsize = jnp.dtype(x.dtype).itemsize
    if not force_kernel and (2 * B * S * D + S * D) * itemsize < min_bytes_for_kernel:
        # Tiny problem: kernel-launch + per-step overhead dominates; let XLA fuse.
        return x + pe[None, :, :]

    N = S * D
    pad = (-N) % LANES
    if pad == 0:
        R = N // LANES
        out = _run_add(x.reshape(B, R, LANES), pe.reshape(R, LANES), target_block_bytes)
        return out.reshape(B, S, D)

    # Rare fallback (S*D not a multiple of 128): pad the flattened row so every
    # block store stays full-width lane-dense, then slice the pad back off.
    R = (N + pad) // LANES
    xf = jnp.pad(x.reshape(B, N), ((0, 0), (0, pad)))
    pef = jnp.pad(pe.reshape(N), (0, pad))
    out = _run_add(xf.reshape(B, R, LANES), pef.reshape(R, LANES), target_block_bytes)
    return out.reshape(B, R * LANES)[:, :N].reshape(B, S, D)


if __name__ == "__main__":
    # Small shapes consistent with the module:
    #   image 16x16, patch 4x4 -> seq = 4*4 = 16 tokens, dim = 32, batch = 2.
    image_h = image_w = 16
    patch_h = patch_w = 4
    dim = 32
    batch = 2
    seq = (image_h // patch_h) * (image_w // patch_w)

    pe = make_surface_pos_emb_2d(image_h, image_w, patch_h, patch_w, dim)

    key = jax.random.PRNGKey(0)
    x = jax.random.normal(key, (batch, seq, dim), dtype=jnp.float32)

    out = surface_pos_emb_2d_forward(x, pe, force_kernel=True)
    out = jax.block_until_ready(out)

    # Reference check in plain JAX.
    ref = x + pe.astype(x.dtype)[None, :, :]
    assert out.shape == (batch, seq, dim)
    assert jnp.allclose(out, ref, atol=1e-6, rtol=1e-6)

    print("KERNEL_OK")
</pallas_src>

<mosaic_0001>
module attributes {stable_mosaic.version = 11 : i64} {
  func.func @_add_pe_kernel(%arg0: i32, %arg1: i32, %arg2: memref<2x4x128xf32, #tpu.memory_space<vmem>>, %arg3: memref<4x128xf32, #tpu.memory_space<vmem>>, %arg4: memref<2x4x128xf32, #tpu.memory_space<vmem>>) attributes {dimension_semantics = [#tpu.dimension_semantics<parallel>, #tpu.dimension_semantics<parallel>], iteration_bounds = array<i64: 1, 1>, scalar_prefetch = 0 : i64, scratch_operands = 0 : i64, tpu.core_type = #tpu.core_type<tc>, window_params = [{transform_indices = @transform_0, window_bounds = array<i64: 2, 4, 128>}, {transform_indices = @transform_1, window_bounds = array<i64: 4, 128>}, {transform_indices = @transform_2, window_bounds = array<i64: 2, 4, 128>}]} {
    %c0 = arith.constant 0 : index
    %c0_0 = arith.constant 0 : index
    %c0_1 = arith.constant 0 : index
    %0 = vector.load %arg2[%c0, %c0_0, %c0_1] : memref<2x4x128xf32, #tpu.memory_space<vmem>>, vector<2x4x128xf32>
    %c0_2 = arith.constant 0 : index
    %c0_3 = arith.constant 0 : index
    %1 = vector.load %arg3[%c0_2, %c0_3] : memref<4x128xf32, #tpu.memory_space<vmem>>, vector<4x128xf32>
    %2 = vector.shape_cast %1 : vector<4x128xf32> to vector<1x4x128xf32>
    %3 = vector.broadcast %2 : vector<1x4x128xf32> to vector<2x4x128xf32>
    %4 = arith.addf %0, %3 : vector<2x4x128xf32>
    %c0_4 = arith.constant 0 : index
    %c0_5 = arith.constant 0 : index
    %c0_6 = arith.constant 0 : index
    %5 = vector.load %arg4[%c0_4, %c0_5, %c0_6] : memref<2x4x128xf32, #tpu.memory_space<vmem>>, vector<2x4x128xf32>
    tpu.vector_store %arg4[%c0_4, %c0_5, %c0_6], %4 {strides = array<i32>} : memref<2x4x128xf32, #tpu.memory_space<vmem>>, vector<2x4x128xf32>,
    return
  }
  func.func @transform_0(%arg0: i32, %arg1: i32) -> (i32, i32, i32) {
    %c0_i32 = arith.constant 0 : i32
    %c0_i32_0 = arith.constant 0 : i32
    return %arg1, %arg0, %c0_i32 : i32, i32, i32
  }
  func.func @transform_1(%arg0: i32, %arg1: i32) -> (i32, i32) {
    %c0_i32 = arith.constant 0 : i32
    %c0_i32_0 = arith.constant 0 : i32
    return %arg0, %c0_i32 : i32, i32
  }
  func.func @transform_2(%arg0: i32, %arg1: i32) -> (i32, i32, i32) {
    %c0_i32 = arith.constant 0 : i32
    %c0_i32_0 = arith.constant 0 : i32
    return %arg1, %arg0, %c0_i32 : i32, i32, i32
  }
}

</mosaic_0001>

<llo_original>
// kernel: tpu_custom_call.1
$region0: #{tpu_custom_call.1}
  #allocation0 [shape = 'u32[]', space=smem, size = 0x4, offset = 0x4, fixed_abs, tag = 'smem constant byte address 0x4 - core index']
  #allocation1 [shape = 'u32[72,128]{1,0:T(1,128)}', space=vmem, size = 0x9000, scoped, tag = 'internal scratch']
  %s0 = inlined_call_operand.hbm [shape: f32[2,4,128], index: 0, kind: input, shape index: {}]
  %s1 = inlined_call_operand.hbm [shape: f32[4,128], index: 1, kind: input, shape index: {}]
  %s2 = inlined_call_operand.hbm [shape: f32[2,4,128], index: 2, kind: output, shape index: {}]
  %s3 = sld [smem:[#allocation0]]
  $region26: #{tpu_custom_call.1} parent=0
    _
  %s5 = ssub.s32 1, %s3
  %s6 = scalar_select 0, %s5, %s3
  $region1: #{tpu_custom_call.1} parent=0
    #allocation2 [shape = 'u8[4096]{0}', space=vmem, size = 0x1000, scoped, tag = 'input window, operand 0, single buffered']
    #allocation3 [shape = 's32[1]{0}', space=sflag, size = 0x4, scoped, tag = 'scoped memory for tpu_custom_call.1']
    #allocation4 [shape = 's32[1]{0}', space=sflag, size = 0x4, scoped, tag = 'scoped memory for tpu_custom_call.1']
    #allocation5 [shape = 'u8[2048]{0}', space=vmem, size = 0x800, scoped, tag = 'input window, operand 1, single buffered']
    #allocation6 [shape = 's32[1]{0}', space=sflag, size = 0x4, scoped, tag = 'scoped memory for tpu_custom_call.1']
    #allocation7 [shape = 'u8[4096]{0}', space=vmem, size = 0x1000, scoped, tag = 'output window, operand 0, single buffered']
    %7 = vsyncpa [#allocation3], 0
    %8 = vsyncpa [#allocation6], 0
    %9 = vsyncpa [#allocation4], 0
    // Predicated region
    $region2: #{tpu_custom_call.1} parent=1 // pred_check
      _
    $region3: #{tpu_custom_call.1} parent=1 // pred_check_branch
      %11 = sbr.rel (0) target = $region5
    $region4: #{tpu_custom_call.1} parent=1 // pred_region
      %13 = vsyncadd [#allocation3], 0
      %s14 = sshll.u32 %s0, 4
      %s15 = int_to_ptr.hbm [resolvable:$true] %s14
      %s16 = sshll.u32 [#allocation2], 4
      %s17 = int_to_ptr.vmem [resolvable:$true] %s16
      %22 = dma.hbm_to_vmem [thread:$0]  %s15, 128, %s17, [#allocation3], 64, 64, 4
    $region5: #{tpu_custom_call.1} parent=1 // pred_fallthru
      _
    // Predicated region
    $region6: #{tpu_custom_call.1} parent=1 // pred_check
      _
    $region7: #{tpu_custom_call.1} parent=1 // pred_check_branch
      %24 = sbr.rel (0) target = $region9
    $region8: #{tpu_custom_call.1} parent=1 // pred_region
      %26 = vsyncadd [#allocation6], 0
      %s28 = sshll.u32 %s1, 4
      %s29 = int_to_ptr.hbm [resolvable:$true] %s28
      %s30 = sshll.u32 [#allocation5], 4
      %s31 = int_to_ptr.vmem [resolvable:$true] %s30
      %33 = dma.hbm_to_vmem [thread:$0]  %s29, 64, %s31, [#allocation6]
    $region9: #{tpu_custom_call.1} parent=1 // pred_fallthru
      _
    // Predicated region
    $region10: #{tpu_custom_call.1} parent=1 // pred_check
      _
    $region11: #{tpu_custom_call.1} parent=1 // pred_check_branch
      %35 = sbr.rel (0) target = $region13
    $region12: #{tpu_custom_call.1} parent=1 // pred_region
      %37 = dma.done [#allocation3], 128
    $region13: #{tpu_custom_call.1} parent=1 // pred_fallthru
      _
    // Predicated region
    $region14: #{tpu_custom_call.1} parent=1 // pred_check
      _
    $region15: #{tpu_custom_call.1} parent=1 // pred_check_branch
      %39 = sbr.rel (0) target = $region17
    $region16: #{tpu_custom_call.1} parent=1 // pred_region
      %41 = dma.done [#allocation6], 64
    $region17: #{tpu_custom_call.1} parent=1 // pred_fallthru
      _
    %v42 = vld [vmem:[#allocation2] sm:$0xf]
    %v43 = vld [vmem:[#allocation2 + $0x4] sm:$0xf]
    %v44 = vld [vmem:[#allocation5] sm:$0xf]
    %v45 = vadd.f32 %v42, %v44
    %v46 = vadd.f32 %v43, %v44
    %47 = vst [vmem:[#allocation7] sm:$0xf] %v45
    %48 = vst [vmem:[#allocation7 + $0x4] sm:$0xf] %v46
    // Predicated region
    $region18: #{tpu_custom_call.1} parent=1 // pred_check
      _
    $region19: #{tpu_custom_call.1} parent=1 // pred_check_branch
      %50 = sbr.rel (0) target = $region21
    $region20: #{tpu_custom_call.1} parent=1 // pred_region
      %52 = vsyncadd [#allocation4], 0
      %s53 = sshll.u32 [#allocation7], 4
      %s54 = int_to_ptr.vmem [resolvable:$true] %s53
      %s55 = sshll.u32 %s2, 4
      %s56 = int_to_ptr.hbm [resolvable:$true] %s55
      %61 = dma.vmem_to_hbm [thread:$0]  %s54, 128, %s56, [#allocation4], 64, 64, 4
    $region21: #{tpu_custom_call.1} parent=1 // pred_fallthru
      _
    // Predicated region
    $region22: #{tpu_custom_call.1} parent=1 // pred_check
      _
    $region23: #{tpu_custom_call.1} parent=1 // pred_check_branch
      %63 = sbr.rel (0) target = $region25
    $region24: #{tpu_custom_call.1} parent=1 // pred_region
      %65 = dma.done [#allocation4], 128
    $region25: #{tpu_custom_call.1} parent=1 // pred_fallthru
      _
    %66 = vsyncpa [#allocation3], 1
    %67 = vsyncpa [#allocation6], 1
    %68 = vsyncpa [#allocation4], 1

</llo_original>
